<compile_context>
chip_gen: v7x
topology: tpu7x:2x2x1
jax: 0.10.0
libtpu: 0.0.40
codegen_flags: <defaults>
</compile_context>

<pallas_src>
import math

import jax
import jax.numpy as jnp
from jax.experimental import pallas as pl
from jax.experimental.pallas import tpu as pltpu


def _standardize_kernel(h_ref, mean_ref, inv_std_ref, o_ref):
    # (h - mean) * inv_std, mean/inv_std (1, Fp) broadcast over the row tile.
    # Compute in f32; cast only when storing.
    h = h_ref[...].astype(jnp.float32)
    out = (h - mean_ref[...]) * inv_std_ref[...]
    o_ref[...] = out.astype(o_ref.dtype)


def _choose_tile_rows(n_rows_packed: int, f_packed: int) -> int:
    """Pick a packed-row tile that keeps ~4 live f32 buffers under ~12 MiB."""
    budget_bytes = 12 * 1024 * 1024          # safe on v5e/v6e/v7x scoped VMEM
    per_row_bytes = f_packed * 4              # f32 compute path
    tile = budget_bytes // (4 * per_row_bytes)  # 2x in + 2x out (double-buffered)
    tile = min(tile, 1024)                    # diminishing returns past ~1024
    # Don't over-pad tiny inputs: no bigger than the (8-rounded) packed row count.
    needed = max(8, ((n_rows_packed + 7) // 8) * 8)
    tile = min(tile, needed)
    tile = max(8, (tile // 8) * 8)            # multiple of 8 sublanes
    return tile


def standardize(h: jax.Array, mean: jax.Array, std: jax.Array) -> jax.Array:
    """Apply (h - mean) / std with a Pallas TPU kernel.

    h:    [N, F] node features (f32 or bf16)
    mean: [F]    featurewise mean
    std:  [F]    featurewise std
    """
    N, F = h.shape
    assert mean.shape == (F,) and std.shape == (F,)

    # Precompute in f32 (one tiny reciprocal; removes divide from the kernel).
    mean_f32 = mean.astype(jnp.float32)
    inv_std_f32 = 1.0 / std.astype(jnp.float32)

    # Lane-dense packing factor: smallest r with (r * F) % 128 == 0.
    r = 128 // math.gcd(F, 128)
    f_packed = r * F

    # Packed row count (before padding) and tile size.
    n_rows_packed = -(-N // r)
    tile_n = _choose_tile_rows(n_rows_packed, f_packed)

    # Pad N so that the packed matrix has an exact number of full tiles.
    rows_per_tile = r * tile_n
    n_pad = pl.cdiv(N, rows_per_tile) * rows_per_tile
    if n_pad != N:
        h_in = jnp.pad(h, ((0, n_pad - N), (0, 0)))
    else:
        h_in = h
    n_packed = n_pad // r

    # Pack rows r-at-a-time along the feature axis: (n_packed, r*F), row-major,
    # so packed[:, k] carries feature k % F  ->  tile mean/inv_std r times.
    h_packed = h_in.reshape(n_packed, f_packed)
    mean_packed = jnp.tile(mean_f32, r).reshape(1, f_packed)
    inv_std_packed = jnp.tile(inv_std_f32, r).reshape(1, f_packed)

    grid = (n_packed // tile_n,)

    out_packed = pl.pallas_call(
        _standardize_kernel,
        out_shape=jax.ShapeDtypeStruct((n_packed, f_packed), h.dtype),
        grid_spec=pltpu.PrefetchScalarGridSpec(
            num_scalar_prefetch=0,
            grid=grid,
            in_specs=[
                pl.BlockSpec((tile_n, f_packed), lambda i: (i, 0)),  # h tile
                pl.BlockSpec((1, f_packed), lambda i: (0, 0)),       # mean (resident)
                pl.BlockSpec((1, f_packed), lambda i: (0, 0)),       # inv_std (resident)
            ],
            out_specs=pl.BlockSpec((tile_n, f_packed), lambda i: (i, 0)),
        ),
        compiler_params=pltpu.CompilerParams(
            dimension_semantics=("parallel",),   # row axis shards across TCs (v7x)
            vmem_limit_bytes=32 * 1024 * 1024,   # lift v5e's 16 MiB scoped default
        ),
    )(h_packed, mean_packed, inv_std_packed)

    # Unpack and drop padding rows.
    out = out_packed.reshape(n_pad, F)
    if n_pad != N:
        out = out[:N]
    return out


class Standardize:
    """JAX/Pallas port: standardize atom_features with registered mean/std.

    The DGL graph is represented as a plain dict of ndata arrays; only
    'atom_features' is touched, mirroring the PyTorch forward.
    """

    def __init__(self, mean: jax.Array, std: jax.Array):
        self.mean = mean
        self.std = std

    def __call__(self, g: dict) -> dict:
        g = dict(g)  # local_var(): don't mutate the caller's graph data
        h = g.pop('atom_features')
        g['atom_features'] = standardize(h, self.mean, self.std)
        return g


if __name__ == "__main__":
    key = jax.random.PRNGKey(0)
    k_h, k_m, k_s = jax.random.split(key, 3)

    # Small shapes consistent with the module: 19 nodes (ragged on purpose),
    # 32-dim atom features (F % 128 != 0 -> exercises lane-dense packing).
    N, F = 19, 32
    h = jax.random.normal(k_h, (N, F), dtype=jnp.float32) * 3.0 + 1.5
    mean = jax.random.normal(k_m, (F,), dtype=jnp.float32)
    std = jax.random.uniform(k_s, (F,), dtype=jnp.float32, minval=0.5, maxval=2.0)

    # "graph": dict of node data (the only field the module touches)
    graph = {'atom_features': h}

    module = Standardize(mean, std)
    out_graph = module(graph)
    out = jax.block_until_ready(out_graph['atom_features'])

    # reference check (kernel uses mul-by-reciprocal, allow tiny rounding diff)
    ref = (h - mean[None, :]) / std[None, :]
    assert out.shape == (N, F)
    assert jnp.allclose(out, ref, atol=1e-5, rtol=1e-5)

    print("KERNEL_OK")
</pallas_src>

<mosaic_0001>
module attributes {stable_mosaic.version = 11 : i64} {
  func.func @_standardize_kernel(%arg0: i32, %arg1: memref<8x128xf32, #tpu.memory_space<vmem>>, %arg2: memref<1x128xf32, #tpu.memory_space<vmem>>, %arg3: memref<1x128xf32, #tpu.memory_space<vmem>>, %arg4: memref<8x128xf32, #tpu.memory_space<vmem>>) attributes {dimension_semantics = [#tpu.dimension_semantics<parallel>], iteration_bounds = array<i64: 1>, scalar_prefetch = 0 : i64, scratch_operands = 0 : i64, tpu.core_type = #tpu.core_type<tc>, window_params = [{transform_indices = @transform_0, window_bounds = array<i64: 8, 128>}, {pipeline_mode = #tpu.pipeline_mode<synchronous>, transform_indices = @transform_1, window_bounds = array<i64: 1, 128>}, {pipeline_mode = #tpu.pipeline_mode<synchronous>, transform_indices = @transform_2, window_bounds = array<i64: 1, 128>}, {transform_indices = @transform_3, window_bounds = array<i64: 8, 128>}]} {
    %c0 = arith.constant 0 : index
    %c0_0 = arith.constant 0 : index
    %0 = vector.load %arg1[%c0, %c0_0] : memref<8x128xf32, #tpu.memory_space<vmem>>, vector<8x128xf32>
    %c0_1 = arith.constant 0 : index
    %c0_2 = arith.constant 0 : index
    %1 = vector.load %arg2[%c0_1, %c0_2] : memref<1x128xf32, #tpu.memory_space<vmem>>, vector<1x128xf32>
    %2 = vector.broadcast %1 : vector<1x128xf32> to vector<8x128xf32>
    %3 = arith.subf %0, %2 : vector<8x128xf32>
    %c0_3 = arith.constant 0 : index
    %c0_4 = arith.constant 0 : index
    %4 = vector.load %arg3[%c0_3, %c0_4] : memref<1x128xf32, #tpu.memory_space<vmem>>, vector<1x128xf32>
    %5 = vector.broadcast %4 : vector<1x128xf32> to vector<8x128xf32>
    %6 = arith.mulf %3, %5 : vector<8x128xf32>
    %c0_5 = arith.constant 0 : index
    %c0_6 = arith.constant 0 : index
    %7 = vector.load %arg4[%c0_5, %c0_6] : memref<8x128xf32, #tpu.memory_space<vmem>>, vector<8x128xf32>
    tpu.vector_store %arg4[%c0_5, %c0_6], %6 {strides = array<i32>} : memref<8x128xf32, #tpu.memory_space<vmem>>, vector<8x128xf32>,
    return
  }
  func.func @transform_0(%arg0: i32) -> (i32, i32) {
    %c0_i32 = arith.constant 0 : i32
    %c0_i32_0 = arith.constant 0 : i32
    return %arg0, %c0_i32 : i32, i32
  }
  func.func @transform_1(%arg0: i32) -> (i32, i32) {
    %c0_i32 = arith.constant 0 : i32
    %c0_i32_0 = arith.constant 0 : i32
    %c0_i32_1 = arith.constant 0 : i32
    return %c0_i32, %c0_i32_0 : i32, i32
  }
  func.func @transform_2(%arg0: i32) -> (i32, i32) {
    %c0_i32 = arith.constant 0 : i32
    %c0_i32_0 = arith.constant 0 : i32
    %c0_i32_1 = arith.constant 0 : i32
    return %c0_i32, %c0_i32_0 : i32, i32
  }
  func.func @transform_3(%arg0: i32) -> (i32, i32) {
    %c0_i32 = arith.constant 0 : i32
    %c0_i32_0 = arith.constant 0 : i32
    return %arg0, %c0_i32 : i32, i32
  }
}

</mosaic_0001>

<llo_original>
// kernel: tpu_custom_call.1
$region0: #{tpu_custom_call.1}
  #allocation0 [shape = 'u32[]', space=smem, size = 0x4, offset = 0x4, fixed_abs, tag = 'smem constant byte address 0x4 - core index']
  #allocation1 [shape = 'u32[144,128]{1,0:T(1,128)}', space=vmem, size = 0x12000, scoped, tag = 'internal scratch']
  %s0 = inlined_call_operand.hbm [shape: f32[8,128], index: 0, kind: input, shape index: {}]
  %s1 = inlined_call_operand.vmem [shape: f32[1,128], index: 1, kind: input, shape index: {}]
  %s2 = inlined_call_operand.vmem [shape: f32[1,128], index: 2, kind: input, shape index: {}]
  %s3 = inlined_call_operand.hbm [shape: f32[8,128], index: 3, kind: output, shape index: {}]
  %s4 = sld [smem:[#allocation0]]
  $region26: #{tpu_custom_call.1} parent=0
    _
  %s6 = ssub.s32 1, %s4
  %s7 = scalar_select 0, %s6, %s4
  $region1: #{tpu_custom_call.1} parent=0
    #allocation2 [shape = 'u8[4096]{0}', space=vmem, size = 0x1000, scoped, tag = 'input window, operand 0, single buffered']
    #allocation3 [shape = 's32[1]{0}', space=sflag, size = 0x4, scoped, tag = 'scoped memory for tpu_custom_call.1']
    #allocation4 [shape = 's32[1]{0}', space=sflag, size = 0x4, scoped, tag = 'scoped memory for tpu_custom_call.1']
    #allocation5 [shape = 'u8[4096]{0}', space=vmem, size = 0x1000, scoped, tag = 'output window, operand 0, single buffered']
    %8 = vsyncpa [#allocation3], 0
    %9 = vsyncpa [#allocation4], 0
    // Predicated region
    $region2: #{tpu_custom_call.1} parent=1 // pred_check
      _
    $region3: #{tpu_custom_call.1} parent=1 // pred_check_branch
      %11 = sbr.rel (0) target = $region5
    $region4: #{tpu_custom_call.1} parent=1 // pred_region
      %s13 = ssub.s32 128, 128
      %14 = vsyncadd [#allocation3], %s13
      %s16 = sshll.u32 [#allocation2], 4
      %s17 = int_to_ptr.vmem [resolvable:$true] %s16
      %19 = dma.hbm_to_vmem [thread:$0]  %s0, 128, %s17, [#allocation3]
    $region5: #{tpu_custom_call.1} parent=1 // pred_fallthru
      _
    // Predicated region
    $region6: #{tpu_custom_call.1} parent=1 // pred_check
      _
    $region7: #{tpu_custom_call.1} parent=1 // pred_check_branch
      %21 = sbr.rel (0) target = $region9
    $region8: #{tpu_custom_call.1} parent=1 // pred_region
      _
    $region9: #{tpu_custom_call.1} parent=1 // pred_fallthru
      _
    // Predicated region
    $region10: #{tpu_custom_call.1} parent=1 // pred_check
      _
    $region11: #{tpu_custom_call.1} parent=1 // pred_check_branch
      %23 = sbr.rel (0) target = $region13
    $region12: #{tpu_custom_call.1} parent=1 // pred_region
      _
    $region13: #{tpu_custom_call.1} parent=1 // pred_fallthru
      _
    // Predicated region
    $region14: #{tpu_custom_call.1} parent=1 // pred_check
      _
    $region15: #{tpu_custom_call.1} parent=1 // pred_check_branch
      %25 = sbr.rel (0) target = $region17
    $region16: #{tpu_custom_call.1} parent=1 // pred_region
      %26 = dma.done [#allocation3], 128
    $region17: #{tpu_custom_call.1} parent=1 // pred_fallthru
      _
    %v27 = vld [vmem:[#allocation2] sm:$0xff]
    %v28 = vld [vmem:[%s1] sm:$0x1]
    %v30 = vlaneseq
    %v31 = vshrl.u32 %v30, 7
    %v32 = vsub.s32 0, %v31
    %v33 = vrot.slane %v28, %v32
    %v35 = vsub.f32 %v27, %v33
    %v36 = vld [vmem:[%s2] sm:$0x1]
    %v38 = vlaneseq
    %v39 = vshrl.u32 %v38, 7
    %v40 = vsub.s32 0, %v39
    %v41 = vrot.slane %v36, %v40
    %v43 = vmul.f32 %v35, %v41
    %44 = vst [vmem:[#allocation5] sm:$0xff] %v43
    // Predicated region
    $region18: #{tpu_custom_call.1} parent=1 // pred_check
      _
    $region19: #{tpu_custom_call.1} parent=1 // pred_check_branch
      %46 = sbr.rel (0) target = $region21
    $region20: #{tpu_custom_call.1} parent=1 // pred_region
      %s48 = ssub.s32 128, 128
      %49 = vsyncadd [#allocation4], %s48
      %s51 = sshll.u32 [#allocation5], 4
      %s52 = int_to_ptr.vmem [resolvable:$true] %s51
      %54 = dma.vmem_to_hbm [thread:$0]  %s52, 128, %s3, [#allocation4]
    $region21: #{tpu_custom_call.1} parent=1 // pred_fallthru
      _
    // Predicated region
    $region22: #{tpu_custom_call.1} parent=1 // pred_check
      _
    $region23: #{tpu_custom_call.1} parent=1 // pred_check_branch
      %56 = sbr.rel (0) target = $region25
    $region24: #{tpu_custom_call.1} parent=1 // pred_region
      %57 = dma.done [#allocation4], 128
    $region25: #{tpu_custom_call.1} parent=1 // pred_fallthru
      _
    %58 = vsyncpa [#allocation3], 1
    %59 = vsyncpa [#allocation4], 1

</llo_original>
